<compile_context>
chip_gen: v7x
topology: tpu7x:2x2x1
jax: 0.10.0
libtpu: 0.0.40
codegen_flags: <defaults>
</compile_context>

<pallas_src>
import math

import jax
import jax.numpy as jnp
from jax.experimental import pallas as pl
from jax.experimental.pallas import tpu as pltpu


def _round_up(x, m):
    return ((x + m - 1) // m) * m


def _pad_to(a, shape):
    pads = tuple((0, t - s) for s, t in zip(a.shape, shape))
    if all(p == (0, 0) for p in pads):
        return a
    return jnp.pad(a, pads)


def _matmul_kernel(lhs_ref, rhs_ref, o_ref, acc_ref):
    # lhs_ref: (TM, TK), rhs_ref: (TK, TN), o_ref: (TM, TN), acc_ref: (TM, TN) f32
    k = pl.program_id(3)

    @pl.when(k == 0)
    def _():
        acc_ref[...] = jnp.zeros_like(acc_ref)

    acc_ref[...] += jnp.dot(
        lhs_ref[...], rhs_ref[...], preferred_element_type=jnp.float32
    )

    @pl.when(k == pl.num_programs(3) - 1)
    def _():
        o_ref[...] = acc_ref[...].astype(o_ref.dtype)


def _batched_matmul(lhs, rhs, *, tm, tk, tn, out_dtype):
    """lhs: (B, M, K); rhs: (K, N) shared or (B, K, N) per-batch -> (B, M, N)."""
    B, M, K = lhs.shape
    N = rhs.shape[-1]
    assert M % tm == 0 and K % tk == 0 and N % tn == 0
    grid = (B, M // tm, N // tn, K // tk)

    lhs_spec = pl.BlockSpec((pl.Squeezed(), tm, tk), lambda b, i, j, k: (b, i, k))
    if rhs.ndim == 2:
        rhs_spec = pl.BlockSpec((tk, tn), lambda b, i, j, k: (k, j))
    else:
        rhs_spec = pl.BlockSpec((pl.Squeezed(), tk, tn), lambda b, i, j, k: (b, k, j))
    out_spec = pl.BlockSpec((pl.Squeezed(), tm, tn), lambda b, i, j, k: (b, i, j))

    out_dtype = jnp.dtype(out_dtype)
    bytes_accessed = (
        lhs.size * lhs.dtype.itemsize
        + rhs.size * rhs.dtype.itemsize
        + B * M * N * out_dtype.itemsize
    )
    cost = pl.CostEstimate(
        flops=2 * B * M * N * K, transcendentals=0, bytes_accessed=bytes_accessed
    )

    return pl.pallas_call(
        _matmul_kernel,
        out_shape=jax.ShapeDtypeStruct((B, M, N), out_dtype),
        grid_spec=pltpu.PrefetchScalarGridSpec(
            num_scalar_prefetch=0,
            grid=grid,
            in_specs=[lhs_spec, rhs_spec],
            out_specs=out_spec,
            scratch_shapes=[pltpu.VMEM((tm, tn), jnp.float32)],
        ),
        compiler_params=pltpu.CompilerParams(
            dimension_semantics=("parallel", "parallel", "parallel", "arbitrary"),
            vmem_limit_bytes=32 * 1024 * 1024,
        ),
        cost_estimate=cost,
    )(lhs, rhs)


def graph_convolution2(x, adj, weight, *, compute_dtype=jnp.bfloat16):
    """x: [B, N, F_in], adj: [B, N, N], weight: [F_in, F_out] -> [B, N, F_out]."""
    B, N, F_in = x.shape
    F_out = weight.shape[1]
    out_dtype = x.dtype

    # MXU-friendly tiles, clipped to the (padded) problem size.
    # N serves both as a row (sublane) dim and as the stage-2 contraction
    # (lane) dim, so its tile is a multiple of 128 and <= 256.
    t_n = min(256, _round_up(N, 128))
    t_fi = min(512, _round_up(F_in, 128))
    t_fo = min(256, _round_up(F_out, 128))
    n_pad = _round_up(N, t_n)
    fi_pad = _round_up(F_in, t_fi)
    fo_pad = _round_up(F_out, t_fo)

    x_p = _pad_to(x.astype(compute_dtype), (B, n_pad, fi_pad))
    adj_p = _pad_to(adj.astype(compute_dtype), (B, n_pad, n_pad))
    w_p = _pad_to(weight.astype(compute_dtype), (fi_pad, fo_pad))

    # Stage 1: support = x @ W  (computed exactly once; f32 accumulation).
    support = _batched_matmul(
        x_p, w_p, tm=t_n, tk=t_fi, tn=t_fo, out_dtype=compute_dtype
    )
    # Stage 2: out = adj @ support  (f32 accumulation, output in input dtype).
    out_p = _batched_matmul(
        adj_p, support, tm=t_n, tk=t_n, tn=t_fo, out_dtype=out_dtype
    )

    return out_p[:, :N, :F_out]


def init_params(key, in_features, out_features):
    # Matches reset_parameters(): uniform(-stdv, stdv) with stdv = 1/sqrt(out_features).
    stdv = 1.0 / math.sqrt(out_features)
    kw, kb = jax.random.split(key)
    weight = jax.random.uniform(
        kw, (in_features, out_features), jnp.float32, minval=-stdv, maxval=stdv
    )
    bias = jax.random.uniform(
        kb, (out_features,), jnp.float32, minval=-stdv, maxval=stdv
    )
    # bias is unused in forward (mirrors the PyTorch module).
    return weight, bias


if __name__ == "__main__":
    key = jax.random.PRNGKey(0)
    B, N, F_in, F_out = 2, 8, 16, 32

    k1, k2, k3 = jax.random.split(key, 3)
    x = jax.random.normal(k1, (B, N, F_in), jnp.float32)
    adj = jax.random.normal(k2, (B, N, N), jnp.float32)
    weight, bias = init_params(k3, F_in, F_out)

    out = graph_convolution2(x, adj, weight)
    out = jax.block_until_ready(out)
    assert out.shape == (B, N, F_out)

    # Reference mirroring the kernel's bf16-operand / f32-accumulate path.
    x_bf = x.astype(jnp.bfloat16)
    adj_bf = adj.astype(jnp.bfloat16)
    w_bf = weight.astype(jnp.bfloat16)
    support_ref = jnp.matmul(
        x_bf, w_bf, preferred_element_type=jnp.float32
    ).astype(jnp.bfloat16)
    ref_bf = jnp.matmul(
        adj_bf, support_ref, preferred_element_type=jnp.float32
    ).astype(x.dtype)
    assert jnp.allclose(out, ref_bf, atol=2e-2, rtol=2e-2)

    # Loose check against the pure-f32 PyTorch-equivalent reference.
    ref_f32 = jnp.matmul(adj, jnp.matmul(x, weight))
    assert jnp.allclose(out, ref_f32, atol=1e-1, rtol=1e-1)

    print("KERNEL_OK")
</pallas_src>

<mosaic_0001>
module attributes {stable_mosaic.version = 11 : i64} {
  func.func @_matmul_kernel(%arg0: i32, %arg1: i32, %arg2: i32, %arg3: i32, %arg4: memref<1x128x128xbf16, #tpu.memory_space<vmem>>, %arg5: memref<128x128xbf16, #tpu.memory_space<vmem>>, %arg6: memref<1x128x128xbf16, #tpu.memory_space<vmem>>, %arg7: memref<128x128xf32, #tpu.memory_space<vmem>>) attributes {dimension_semantics = [#tpu.dimension_semantics<parallel>, #tpu.dimension_semantics<parallel>, #tpu.dimension_semantics<parallel>, #tpu.dimension_semantics<arbitrary>], iteration_bounds = array<i64: 2, 1, 1, 1>, scalar_prefetch = 0 : i64, scratch_operands = 1 : i64, tpu.core_type = #tpu.core_type<tc>, window_params = [{transform_indices = @transform_0, window_bounds = array<i64: 1, 128, 128>}, {transform_indices = @transform_1, window_bounds = array<i64: 128, 128>}, {transform_indices = @transform_2, window_bounds = array<i64: 1, 128, 128>}]} {
    %c0_i32 = arith.constant 0 : i32
    %0 = arith.cmpi eq, %arg3, %c0_i32 : i32
    %1 = arith.extui %0 : i1 to i32
    %c0_i32_0 = arith.constant 0 : i32
    %2 = arith.cmpi ne, %1, %c0_i32_0 : i32
    scf.if %2 {
      %cst_11 = arith.constant 0.000000e+00 : f32
      %13 = vector.broadcast %cst_11 : f32 to vector<128x128xf32>
      %c0_12 = arith.constant 0 : index
      %c0_13 = arith.constant 0 : index
      %14 = vector.load %arg7[%c0_12, %c0_13] : memref<128x128xf32, #tpu.memory_space<vmem>>, vector<128x128xf32>
      tpu.vector_store %arg7[%c0_12, %c0_13], %13 {strides = array<i32>} : memref<128x128xf32, #tpu.memory_space<vmem>>, vector<128x128xf32>,
    } else {
    }
    %c0 = arith.constant 0 : index
    %c0_1 = arith.constant 0 : index
    %3 = vector.load %arg7[%c0, %c0_1] : memref<128x128xf32, #tpu.memory_space<vmem>>, vector<128x128xf32>
    %c0_2 = arith.constant 0 : index
    %c0_3 = arith.constant 0 : index
    %c0_4 = arith.constant 0 : index
    %4 = vector.load %arg4[%c0_2, %c0_3, %c0_4] : memref<1x128x128xbf16, #tpu.memory_space<vmem>>, vector<1x128x128xbf16>
    %5 = vector.shape_cast %4 : vector<1x128x128xbf16> to vector<128x128xbf16>
    %c0_5 = arith.constant 0 : index
    %c0_6 = arith.constant 0 : index
    %6 = vector.load %arg5[%c0_5, %c0_6] : memref<128x128xbf16, #tpu.memory_space<vmem>>, vector<128x128xbf16>
    %cst = arith.constant dense<0.000000e+00> : vector<128x128xf32>
    %7 = tpu.matmul %5, %6, %cst {dimension_numbers = #tpu.dot_dimension_numbers<[1], [0], [0], [1], [0, 0, 1, 1], [], []>} : vector<128x128xbf16>, vector<128x128xbf16>, vector<128x128xf32> -> vector<128x128xf32>
    %8 = arith.addf %3, %7 : vector<128x128xf32>
    %c0_7 = arith.constant 0 : index
    %c0_8 = arith.constant 0 : index
    %9 = vector.load %arg7[%c0_7, %c0_8] : memref<128x128xf32, #tpu.memory_space<vmem>>, vector<128x128xf32>
    tpu.vector_store %arg7[%c0_7, %c0_8], %8 {strides = array<i32>} : memref<128x128xf32, #tpu.memory_space<vmem>>, vector<128x128xf32>,
    %c0_i32_9 = arith.constant 0 : i32
    %10 = arith.cmpi eq, %arg3, %c0_i32_9 : i32
    %11 = arith.extui %10 : i1 to i32
    %c0_i32_10 = arith.constant 0 : i32
    %12 = arith.cmpi ne, %11, %c0_i32_10 : i32
    scf.if %12 {
      %c0_11 = arith.constant 0 : index
      %c0_12 = arith.constant 0 : index
      %13 = vector.load %arg7[%c0_11, %c0_12] : memref<128x128xf32, #tpu.memory_space<vmem>>, vector<128x128xf32>
      %14 = arith.truncf %13 : vector<128x128xf32> to vector<128x128xbf16>
      %c0_13 = arith.constant 0 : index
      %c0_14 = arith.constant 0 : index
      %c0_15 = arith.constant 0 : index
      %15 = vector.load %arg6[%c0_13, %c0_14, %c0_15] : memref<1x128x128xbf16, #tpu.memory_space<vmem>>, vector<1x128x128xbf16>
      %16 = vector.shape_cast %15 : vector<1x128x128xbf16> to vector<128x128xbf16>
      %17 = vector.shape_cast %14 : vector<128x128xbf16> to vector<1x128x128xbf16>
      tpu.vector_store %arg6[%c0_13, %c0_14, %c0_15], %17 {strides = array<i32>} : memref<1x128x128xbf16, #tpu.memory_space<vmem>>, vector<1x128x128xbf16>,
    } else {
    }
    return
  }
  func.func @transform_0(%arg0: i32, %arg1: i32, %arg2: i32, %arg3: i32) -> (i32, i32, i32) {
    %c0_i32 = arith.constant 0 : i32
    return %arg0, %arg1, %arg3 : i32, i32, i32
  }
  func.func @transform_1(%arg0: i32, %arg1: i32, %arg2: i32, %arg3: i32) -> (i32, i32) {
    %c0_i32 = arith.constant 0 : i32
    return %arg3, %arg2 : i32, i32
  }
  func.func @transform_2(%arg0: i32, %arg1: i32, %arg2: i32, %arg3: i32) -> (i32, i32, i32) {
    %c0_i32 = arith.constant 0 : i32
    return %arg0, %arg1, %arg2 : i32, i32, i32
  }
}

</mosaic_0001>

<llo_original>
// kernel: tpu_custom_call.1
$region0: #{tpu_custom_call.1}
  #allocation0 [shape = 'u32[]', space=smem, size = 0x4, offset = 0x4, fixed_abs, tag = 'smem constant byte address 0x4 - core index']
  #allocation1 [shape = 'u32[144,128]{1,0:T(1,128)}', space=vmem, size = 0x12000, scoped, tag = 'internal scratch']
  #allocation2 [shape = 'f32[128,128]{1,0:T(8,128)}', space=vmem, size = 0x10000, scoped, tag = 'scratch operand']
  %s0 = inlined_call_operand.hbm [shape: bf16[2,128,128], index: 0, kind: input, shape index: {}]
  %s1 = inlined_call_operand.hbm [shape: bf16[128,128], index: 1, kind: input, shape index: {}]
  %s2 = inlined_call_operand.hbm [shape: bf16[2,128,128], index: 2, kind: output, shape index: {}]
  %s3 = sld [smem:[#allocation0]]
  $region57: #{tpu_custom_call.1} parent=0
    _
  %s5 = ssub.s32 1, %s3
  %s6 = scalar_select 0, %s5, %s3
  $region1: #{tpu_custom_call.1} parent=0
    #allocation3 [shape = 'u8[65536]{0}', space=vmem, size = 0x10000, scoped, tag = 'input window, operand 0']
    #allocation4 [shape = 's32[2]{0}', space=sflag, size = 0x8, scoped, tag = 'scoped memory for tpu_custom_call.1']
    #allocation5 [shape = 's32[2]{0}', space=sflag, size = 0x8, scoped, tag = 'scoped memory for tpu_custom_call.1']
    #allocation6 [shape = 'u8[32768]{0}', space=vmem, size = 0x8000, scoped, tag = 'input window, operand 1, single buffered']
    #allocation7 [shape = 's32[1]{0}', space=sflag, size = 0x4, scoped, tag = 'scoped memory for tpu_custom_call.1']
    #allocation8 [shape = 'u8[65536]{0}', space=vmem, size = 0x10000, scoped, tag = 'output window, operand 0']
    %7 = vsyncpa [#allocation4], 0
    %s8 = scalar_lea.sflag [#allocation4], 1
    %9 = vsyncpa %s8, 0
    %10 = vsyncpa [#allocation7], 0
    %11 = vsyncpa [#allocation5], 0
    %s12 = scalar_lea.sflag [#allocation5], 1
    %13 = vsyncpa %s12, 0
    loop: start=0, step=1, limit=4
    $region2: #{tpu_custom_call.1} parent=1 // loop_pre_header
      _
    $region3: #{tpu_custom_call.1} parent=1 // loop_header
      %s15 = sphi 0, %s19
      %p16 = scmp.ge.s32.totalorder %s15, 4
      %s22 = sphi 0, %s48
      %s23 = sphi 0, %s44
      %s24 = sphi 0, %s40
      %s25 = sphi 0, %s36
      %s26 = sphi 0, %s22
      %s27 = sphi 0, %s23
      %s28 = sphi 0, %s24
      %s29 = sphi 0, %s25
      %s30 = sphi 0, %s26
      %s31 = sphi 0, %s27
      %s32 = sphi 0, %s28
      %s33 = sphi 0, %s29
      %s55 = sphi 0, %s57
      %s58 = sphi 0, %s55
      %s59 = sphi 0, %s58
      %s75 = sphi 0, %s59
      %s83 = sphi 0, %s85
      %s86 = sphi 0, %s83
      %s87 = sphi 0, %s86
      %s103 = sphi 0, %s87
      %s113 = sphi 0, %s115
      %s116 = sphi 0, %s113
      %s117 = sphi 0, %s116
      %s133 = sphi 0, %s117
    $region4: #{tpu_custom_call.1} parent=1 // loop_header_branch
      %18 = sbr.rel (%p16) target = $region8
    $region5: #{tpu_custom_call.1} parent=1 // loop_body
      %s20 = ssub.s32 %s15, 1
      %s21 = ssub.s32 %s15, 2
      %s34 = sadd.s32 1, %s25
      %p35 = scmp.ge.s32.totalorder %s34, 1
      %s36 = scalar_select %p35, 0, %s34
      %s37 = sadd.s32 1, %s24
      %s38 = scalar_select %p35, %s37, %s24
      %p39 = scmp.ge.s32.totalorder %s38, 1
      %s40 = scalar_select %p39, 0, %s38
      %s41 = sadd.s32 1, %s23
      %s42 = scalar_select %p39, %s41, %s23
      %p43 = scmp.ge.s32.totalorder %s42, 1
      %s44 = scalar_select %p43, 0, %s42
      %s45 = sadd.s32 1, %s22
      %s46 = scalar_select %p43, %s45, %s22
      %p47 = scmp.ge.s32.totalorder %s46, 2
      %s48 = scalar_select %p47, 0, %s46
      %s49 = ssub.s32 %s22, %s48
      %s50 = ssub.s32 %s23, %s44
      %s51 = sor.u32 %s49, %s50
      %s52 = ssub.s32 %s25, %s36
      %s53 = sor.u32 %s51, %s52
      %p54 = scmp.eq.s32.totalorder %s53, 0
      %s56 = sadd.s32 %s55, 1
      %s57 = scalar_select %p54, %s55, %s56
      %p60 = pneg %p54
      %p61 = scmp.eq.s32.totalorder %s15, 1
      %p62 = por %p60, %p61
      %p63 = scmp.ne.s32.totalorder %s55, %s58
      %p64 = scmp.eq.s32.totalorder %s15, 0
      %p65 = por %p63, %p64
      %p66 = scmp.ne.s32.totalorder %s55, %s58
      %p67 = scmp.eq.s32.totalorder %s20, 1
      %p68 = por %p66, %p67
      %p69 = scmp.ne.s32.totalorder %s58, %s59
      %p70 = scmp.eq.s32.totalorder %s20, 0
      %p71 = por %p69, %p70
      %p72 = scmp.ne.s32.totalorder %s58, %s59
      %p73 = scmp.eq.s32.totalorder %s21, 1
      %p74 = por %p72, %p73
      %p76 = scmp.ne.s32.totalorder %s59, %s75
      %p77 = scmp.eq.s32.totalorder %s21, 0
      %p78 = por %p76, %p77
      %s79 = ssub.s32 %s25, %s36
      %s80 = ssub.s32 %s24, %s40
      %s81 = sor.u32 %s79, %s80
      %p82 = scmp.eq.s32.totalorder %s81, 0
      %s84 = sadd.s32 %s83, 1
      %s85 = scalar_select %p82, %s83, %s84
      %p88 = pneg %p82
      %p89 = scmp.eq.s32.totalorder %s15, 1
      %p90 = por %p88, %p89
      %p91 = scmp.ne.s32.totalorder %s83, %s86
      %p92 = scmp.eq.s32.totalorder %s15, 0
      %p93 = por %p91, %p92
      %p94 = scmp.ne.s32.totalorder %s83, %s86
      %p95 = scmp.eq.s32.totalorder %s20, 1
      %p96 = por %p94, %p95
      %p97 = scmp.ne.s32.totalorder %s86, %s87
      %p98 = scmp.eq.s32.totalorder %s20, 0
      %p99 = por %p97, %p98
      %p100 = scmp.ne.s32.totalorder %s86, %s87
      %p101 = scmp.eq.s32.totalorder %s21, 1
      %p102 = por %p100, %p101
      %p104 = scmp.ne.s32.totalorder %s87, %s103
      %p105 = scmp.eq.s32.totalorder %s21, 0
      %p106 = por %p104, %p105
      %s107 = ssub.s32 %s22, %s48
      %s108 = ssub.s32 %s23, %s44
      %s109 = sor.u32 %s107, %s108
      %s110 = ssub.s32 %s24, %s40
      %s111 = sor.u32 %s109, %s110
      %p112 = scmp.eq.s32.totalorder %s111, 0
      %s114 = sadd.s32 %s113, 1
      %s115 = scalar_select %p112, %s113, %s114
      %p118 = pneg %p112
      %p119 = scmp.eq.s32.totalorder %s15, 1
      %p120 = por %p118, %p119
      %p121 = scmp.ne.s32.totalorder %s113, %s116
      %p122 = scmp.eq.s32.totalorder %s15, 0
      %p123 = por %p121, %p122
      %p124 = scmp.ne.s32.totalorder %s113, %s116
      %p125 = scmp.eq.s32.totalorder %s20, 1
      %p126 = por %p124, %p125
      %p127 = scmp.ne.s32.totalorder %s116, %s117
      %p128 = scmp.eq.s32.totalorder %s20, 0
      %p129 = por %p127, %p128
      %p130 = scmp.ne.s32.totalorder %s116, %s117
      %p131 = scmp.eq.s32.totalorder %s21, 1
      %p132 = por %p130, %p131
      %p134 = scmp.ne.s32.totalorder %s117, %s133
      %p135 = scmp.eq.s32.totalorder %s21, 0
      %p136 = por %p134, %p135
      %p137 = scmp.le.s32.totalorder 1, %s15
      %p138 = scmp.lt.s32.totalorder %s15, 3
      %p139 = pnand %p137, %p138
      %p140 = pneg %p139
      // Predicated region
      $region9: #{tpu_custom_call.1} parent=5 // pred_check
        _
      $region10: #{tpu_custom_call.1} parent=5 // pred_check_branch
        %142 = sbr.rel (%p139) target = $region12
      $region11: #{tpu_custom_call.1} parent=5 // pred_region
        %s143 = ssub.s32 %s15, 1
        // Predicated region
        $region13: #{tpu_custom_call.1} parent=11 // pred_check
          %p144 = pneg %p99
        $region14: #{tpu_custom_call.1} parent=11 // pred_check_branch
          %146 = sbr.rel (%p144) target = $region16
        $region15: #{tpu_custom_call.1} parent=11 // pred_region
          %s147 = smul.u32 16, %s29
          %s149 = ssub.s32 1024, 1024
          %150 = vsyncadd [#allocation7], %s149
          %s151 = sadd.s32 %s28, %s147
          %s152 = smul.addr %s151, 64
          %s153 = scalar_lea.hbm %s1, %s152
          %s154 = sshll.u32 [#allocation6], 4
          %s155 = int_to_ptr.vmem [resolvable:$true] %s154
          %160 = dma.hbm_to_vmem [thread:$0]  %s153, 1024, %s155, [#allocation7], 64, 64, 4
        $region16: #{tpu_custom_call.1} parent=11 // pred_fallthru
          _
      $region12: #{tpu_custom_call.1} parent=5 // pred_fallthru
        _
      %p161 = scmp.lt.s32.totalorder %s15, 2
      // Predicated region
      $region17: #{tpu_custom_call.1} parent=5 // pred_check
        %p162 = pneg %p161
      $region18: #{tpu_custom_call.1} parent=5 // pred_check_branch
        %164 = sbr.rel (%p162) target = $region20
      $region19: #{tpu_custom_call.1} parent=5 // pred_region
        // Predicated region
        $region21: #{tpu_custom_call.1} parent=19 // pred_check
          %p165 = pneg %p65
        $region22: #{tpu_custom_call.1} parent=19 // pred_check_branch
          %167 = sbr.rel (%p165) target = $region24
        $region23: #{tpu_custom_call.1} parent=19 // pred_region
          %s168 = sand.u32 %s55, 1
          %s169 = scalar_lea.sflag [#allocation4], %s168
          %s170 = sand.u32 %s55, 1
          %s171 = smul.addr %s170, 64
          %s172 = scalar_lea.vmem [#allocation3], %s171
          %s173 = smul.u32 16, %s23
          %s175 = ssub.s32 1024, 1024
          %176 = vsyncadd %s169, %s175
          %s177 = sadd.s32 %s25, %s173
          %s178 = smul.addr %s22, 16
          %s179 = sadd.s32 %s177, %s178
          %s180 = smul.addr %s179, 64
          %s181 = scalar_lea.hbm %s0, %s180
          %s182 = sshll.u32 %s172, 4
          %s183 = int_to_ptr.vmem [resolvable:$true] %s182
          %188 = dma.hbm_to_vmem [thread:$0]  %s181, 1024, %s183, %s169, 64, 64, 4
        $region24: #{tpu_custom_call.1} parent=19 // pred_fallthru
          _
      $region20: #{tpu_custom_call.1} parent=5 // pred_fallthru
        _
      %p189 = scmp.le.s32.totalorder 1, %s15
      %p190 = scmp.lt.s32.totalorder %s15, 3
      %p191 = pnand %p189, %p190
      %p192 = pneg %p191
      // Predicated region
      $region25: #{tpu_custom_call.1} parent=5 // pred_check
        _
      $region26: #{tpu_custom_call.1} parent=5 // pred_check_branch
        %194 = sbr.rel (%p191) target = $region28
      $region27: #{tpu_custom_call.1} parent=5 // pred_region
        %s195 = ssub.s32 %s15, 1
        %s196 = sand.u32 %s58, 1
        %s197 = scalar_lea.sflag [#allocation4], %s196
        %s198 = sand.u32 %s58, 1
        %s199 = smul.addr %s198, 64
        %s200 = scalar_lea.vmem [#allocation3], %s199
        // Predicated region
        $region29: #{tpu_custom_call.1} parent=27 // pred_check
          %p201 = pneg %p71
        $region30: #{tpu_custom_call.1} parent=27 // pred_check_branch
          %203 = sbr.rel (%p201) target = $region32
        $region31: #{tpu_custom_call.1} parent=27 // pred_region
          %204 = dma.done %s197, 1024
        $region32: #{tpu_custom_call.1} parent=27 // pred_fallthru
          _
        // Predicated region
        $region33: #{tpu_custom_call.1} parent=27 // pred_check
          %p205 = pneg %p99
        $region34: #{tpu_custom_call.1} parent=27 // pred_check_branch
          %207 = sbr.rel (%p205) target = $region36
        $region35: #{tpu_custom_call.1} parent=27 // pred_region
          %208 = dma.done [#allocation7], 1024
        $region36: #{tpu_custom_call.1} parent=27 // pred_fallthru
          _
        %s209 = sand.u32 %s58, 1
        %s210 = scalar_lea.sflag [#allocation4], %s209
        %s211 = sand.u32 %s58, 1
        %s212 = smul.addr %s211, 64
        %s213 = scalar_lea.vmem [#allocation3], %s212
        %p214 = pneg %p71
        %p215 = pneg %p68
        %p216 = pneg %p99
        %p217 = pneg %p96
        %p218 = pneg %p129
        %p219 = pneg %p126
        %s220 = sand.u32 %s116, 1
        %s221 = scalar_lea.sflag [#allocation5], %s220
        %s222 = sand.u32 %s116, 1
        %s223 = smul.addr %s222, 64
        %s224 = scalar_lea.vmem [#allocation8], %s223
        %s225 = smul.u32 16, %s27
        %s226 = smul.u32 16, %s29
        %s227 = smul.u32 16, %s27
        %p229 = scmp.eq.s32.totalorder %s29, 0
        // Predicated region
        $region37: #{tpu_custom_call.1} parent=27 // pred_check
          %p230 = pneg %p229
        $region38: #{tpu_custom_call.1} parent=27 // pred_check_branch
          %232 = sbr.rel (%p230) target = $region40
        $region39: #{tpu_custom_call.1} parent=27 // pred_region
          %233 = vst [vmem:[#allocation2] sm:$0xff] 0.0
          %234 = vst [vmem:[#allocation2 + $0x8] sm:$0xff] 0.0
          %235 = vst [vmem:[#allocation2 + $0x10] sm:$0xff] 0.0
          %236 = vst [vmem:[#allocation2 + $0x18] sm:$0xff] 0.0
          %237 = vst [vmem:[#allocation2 + $0x20] sm:$0xff] 0.0
          %238 = vst [vmem:[#allocation2 + $0x28] sm:$0xff] 0.0
          %239 = vst [vmem:[#allocation2 + $0x30] sm:$0xff] 0.0
          %240 = vst [vmem:[#allocation2 + $0x38] sm:$0xff] 0.0
          %241 = vst [vmem:[#allocation2 + $0x40] sm:$0xff] 0.0
          %242 = vst [vmem:[#allocation2 + $0x48] sm:$0xff] 0.0
          %243 = vst [vmem:[#allocation2 + $0x50] sm:$0xff] 0.0
          %244 = vst [vmem:[#allocation2 + $0x58] sm:$0xff] 0.0
          %245 = vst [vmem:[#allocation2 + $0x60] sm:$0xff] 0.0
          %246 = vst [vmem:[#allocation2 + $0x68] sm:$0xff] 0.0
          %247 = vst [vmem:[#allocation2 + $0x70] sm:$0xff] 0.0
          %248 = vst [vmem:[#allocation2 + $0x78] sm:$0xff] 0.0
        $region40: #{tpu_custom_call.1} parent=27 // pred_fallthru
          _
        %v249 = vld [vmem:[#allocation2] sm:$0xff]
        %v250 = vld [vmem:[#allocation2 + $0x8] sm:$0xff]
        %v251 = vld [vmem:[#allocation2 + $0x10] sm:$0xff]
        %v252 = vld [vmem:[#allocation2 + $0x18] sm:$0xff]
        %v253 = vld [vmem:[#allocation2 + $0x20] sm:$0xff]
        %v254 = vld [vmem:[#allocation2 + $0x28] sm:$0xff]
        %v255 = vld [vmem:[#allocation2 + $0x30] sm:$0xff]
        %v256 = vld [vmem:[#allocation2 + $0x38] sm:$0xff]
        %v257 = vld [vmem:[#allocation2 + $0x40] sm:$0xff]
        %v258 = vld [vmem:[#allocation2 + $0x48] sm:$0xff]
        %v259 = vld [vmem:[#allocation2 + $0x50] sm:$0xff]
        %v260 = vld [vmem:[#allocation2 + $0x58] sm:$0xff]
        %v261 = vld [vmem:[#allocation2 + $0x60] sm:$0xff]
        %v262 = vld [vmem:[#allocation2 + $0x68] sm:$0xff]
        %v263 = vld [vmem:[#allocation2 + $0x70] sm:$0xff]
        %v264 = vld [vmem:[#allocation2 + $0x78] sm:$0xff]
        %v265 = vld [vmem:[%s200] sm:$0xf]
        %v266 = vld [vmem:[%s200 + $0x4] sm:$0xf]
        %v267 = vld [vmem:[%s200 + $0x8] sm:$0xf]
        %v268 = vld [vmem:[%s200 + $0xc] sm:$0xf]
        %v269 = vld [vmem:[%s200 + $0x10] sm:$0xf]
        %v270 = vld [vmem:[%s200 + $0x14] sm:$0xf]
        %v271 = vld [vmem:[%s200 + $0x18] sm:$0xf]
        %v272 = vld [vmem:[%s200 + $0x1c] sm:$0xf]
        %v273 = vld [vmem:[%s200 + $0x20] sm:$0xf]
        %v274 = vld [vmem:[%s200 + $0x24] sm:$0xf]
        %v275 = vld [vmem:[%s200 + $0x28] sm:$0xf]
        %v276 = vld [vmem:[%s200 + $0x2c] sm:$0xf]
        %v277 = vld [vmem:[%s200 + $0x30] sm:$0xf]
        %v278 = vld [vmem:[%s200 + $0x34] sm:$0xf]
        %v279 = vld [vmem:[%s200 + $0x38] sm:$0xf]
        %v280 = vld [vmem:[%s200 + $0x3c] sm:$0xf]
        %v281 = vld [vmem:[#allocation6] sm:$0xf]
        %v282 = vld [vmem:[#allocation6 + $0x4] sm:$0xf]
        %v283 = vld [vmem:[#allocation6 + $0x8] sm:$0xf]
        %v284 = vld [vmem:[#allocation6 + $0xc] sm:$0xf]
        %v285 = vld [vmem:[#allocation6 + $0x10] sm:$0xf]
        %v286 = vld [vmem:[#allocation6 + $0x14] sm:$0xf]
        %v287 = vld [vmem:[#allocation6 + $0x18] sm:$0xf]
        %v288 = vld [vmem:[#allocation6 + $0x1c] sm:$0xf]
        %v289 = vld [vmem:[#allocation6 + $0x20] sm:$0xf]
        %v290 = vld [vmem:[#allocation6 + $0x24] sm:$0xf]
        %v291 = vld [vmem:[#allocation6 + $0x28] sm:$0xf]
        %v292 = vld [vmem:[#allocation6 + $0x2c] sm:$0xf]
        %v293 = vld [vmem:[#allocation6 + $0x30] sm:$0xf]
        %v294 = vld [vmem:[#allocation6 + $0x34] sm:$0xf]
        %v295 = vld [vmem:[#allocation6 + $0x38] sm:$0xf]
        %v296 = vld [vmem:[#allocation6 + $0x3c] sm:$0xf]
        %v313 = vunpack.c.l.b16 %v265
        %v314 = vunpack.c.l.b16 %v266
        %v315 = vunpack.c.l.b16 %v267
        %v316 = vunpack.c.l.b16 %v268
        %v317 = vunpack.c.l.b16 %v269
        %v318 = vunpack.c.l.b16 %v270
        %v319 = vunpack.c.l.b16 %v271
        %v320 = vunpack.c.l.b16 %v272
        %v321 = vunpack.c.l.b16 %v273
        %v322 = vunpack.c.l.b16 %v274
        %v323 = vunpack.c.l.b16 %v275
        %v324 = vunpack.c.l.b16 %v276
        %v325 = vunpack.c.l.b16 %v277
        %v326 = vunpack.c.l.b16 %v278
        %v327 = vunpack.c.l.b16 %v279
        %v328 = vunpack.c.l.b16 %v280
        %v329 = vpack.c.b16 %v314, %v313
        %v330 = vpack.c.b16 %v316, %v315
        %v331 = vpack.c.b16 %v318, %v317
        %v332 = vpack.c.b16 %v320, %v319
        %v333 = vpack.c.b16 %v322, %v321
        %v334 = vpack.c.b16 %v324, %v323
        %v335 = vpack.c.b16 %v326, %v325
        %v336 = vpack.c.b16 %v328, %v327
        %v361 = vunpack.c.l.b16 %v281
        %v362 = vunpack.c.l.b16 %v282
        %v363 = vunpack.c.l.b16 %v283
        %v364 = vunpack.c.l.b16 %v284
        %v365 = vunpack.c.l.b16 %v285
        %v366 = vunpack.c.l.b16 %v286
        %v367 = vunpack.c.l.b16 %v287
        %v368 = vunpack.c.l.b16 %v288
        %v369 = vunpack.c.l.b16 %v289
        %v370 = vunpack.c.l.b16 %v290
        %v371 = vunpack.c.l.b16 %v291
        %v372 = vunpack.c.l.b16 %v292
        %v373 = vunpack.c.l.b16 %v293
        %v374 = vunpack.c.l.b16 %v294
        %v375 = vunpack.c.l.b16 %v295
        %v376 = vunpack.c.l.b16 %v296
        %v377 = vpack.c.b16 %v362, %v361
        %v378 = vpack.c.b16 %v364, %v363
        %v379 = vpack.c.b16 %v366, %v365
        %v380 = vpack.c.b16 %v368, %v367
        %v381 = vpack.c.b16 %v370, %v369
        %v382 = vpack.c.b16 %v372, %v371
        %v383 = vpack.c.b16 %v374, %v373
        %v384 = vpack.c.b16 %v376, %v375
        %393 = vmatprep.subr.bf16.mxu0 0
        %394 = vmatpush1.bf16.msra.mxu0 %v377
        %395 = vmatprep.subr.bf16.mxu0 0
        %396 = vmatpush1.bf16.msra.mxu0 %v378
        %397 = vmatprep.subr.bf16.mxu0 0
        %398 = vmatpush1.bf16.msra.mxu0 %v379
        %399 = vmatprep.subr.bf16.mxu0 0
        %400 = vmatpush1.bf16.msra.mxu0 %v380
        %401 = vmatprep.subr.bf16.mxu0 0
        %402 = vmatpush1.bf16.msra.mxu0 %v381
        %403 = vmatprep.subr.bf16.mxu0 0
        %404 = vmatpush1.bf16.msra.mxu0 %v382
        %405 = vmatprep.subr.bf16.mxu0 0
        %406 = vmatpush1.bf16.msra.mxu0 %v383
        %407 = vmatprep.subr.bf16.mxu0 0
        %408 = vmatpush1.bf16.msra.mxu0 %v384
        %409 = vmatprep.subr.bf16.mxu0 0
        %410 = vmatpush1.bf16.msra.mxu0 0
        %411 = vmatprep.subr.bf16.mxu0 0
        %412 = vmatpush1.bf16.msra.mxu0 0
        %413 = vmatprep.subr.bf16.mxu0 0
        %414 = vmatpush1.bf16.msra.mxu0 0
        %415 = vmatprep.subr.bf16.mxu0 0
        %416 = vmatpush1.bf16.msra.mxu0 0
        %417 = vmatprep.subr.bf16.mxu0 0
        %418 = vmatpush1.bf16.msra.mxu0 0
        %419 = vmatprep.subr.bf16.mxu0 0
        %420 = vmatpush1.bf16.msra.mxu0 0
        %421 = vmatprep.subr.bf16.mxu0 0
        %422 = vmatpush1.bf16.msra.mxu0 0
        %423 = vmatprep.subr.bf16.mxu0 0
        %424 = vmatpush1.bf16.msra.mxu0 0
        %425 = vmatprep.mubr.bf16.mxu0 0
        %426 = vmatmul.mubr.bf16.gmra.mrb[0].mxu0 %v329
        %v427 = vpop.f32.mrb[0].mxu0
        %v428 = vadd.f32 0.0, %v427
        %v429 = vpop.f32.mrb[0].mxu0
        %v430 = vpop.f32.mrb[0].mxu0
        %v431 = vadd.f32 0.0, %v430
        %v432 = vpop.f32.mrb[0].mxu0
        %433 = vmatprep.mubr.bf16.mxu0 0
        %434 = vmatmul.mubr.bf16.gmra.mrb[0].mxu0 %v330
        %v435 = vpop.f32.mrb[0].mxu0
        %v436 = vadd.f32 0.0, %v435
        %v437 = vpop.f32.mrb[0].mxu0
        %v438 = vpop.f32.mrb[0].mxu0
        %v439 = vadd.f32 0.0, %v438
        %v440 = vpop.f32.mrb[0].mxu0
        %441 = vmatprep.mubr.bf16.mxu0 0
        %442 = vmatmul.mubr.bf16.gmra.mrb[0].mxu0 %v331
        %v443 = vpop.f32.mrb[0].mxu0
        %v444 = vadd.f32 0.0, %v443
        %v445 = vpop.f32.mrb[0].mxu0
        %v446 = vpop.f32.mrb[0].mxu0
        %v447 = vadd.f32 0.0, %v446
        %v448 = vpop.f32.mrb[0].mxu0
        %449 = vmatprep.mubr.bf16.mxu0 0
        %450 = vmatmul.mubr.bf16.gmra.mrb[0].mxu0 %v332
        %v451 = vpop.f32.mrb[0].mxu0
        %v452 = vadd.f32 0.0, %v451
        %v453 = vpop.f32.mrb[0].mxu0
        %v454 = vpop.f32.mrb[0].mxu0
        %v455 = vadd.f32 0.0, %v454
        %v456 = vpop.f32.mrb[0].mxu0
        %457 = vmatprep.mubr.bf16.mxu0 0
        %458 = vmatmul.mubr.bf16.gmra.mrb[0].mxu0 %v333
        %v459 = vpop.f32.mrb[0].mxu0
        %v460 = vadd.f32 0.0, %v459
        %v461 = vpop.f32.mrb[0].mxu0
        %v462 = vpop.f32.mrb[0].mxu0
        %v463 = vadd.f32 0.0, %v462
        %v464 = vpop.f32.mrb[0].mxu0
        %465 = vmatprep.mubr.bf16.mxu0 0
        %466 = vmatmul.mubr.bf16.gmra.mrb[0].mxu0 %v334
        %v467 = vpop.f32.mrb[0].mxu0
        %v468 = vadd.f32 0.0, %v467
        %v469 = vpop.f32.mrb[0].mxu0
        %v470 = vpop.f32.mrb[0].mxu0
        %v471 = vadd.f32 0.0, %v470
        %v472 = vpop.f32.mrb[0].mxu0
        %473 = vmatprep.mubr.bf16.mxu0 0
        %474 = vmatmul.mubr.bf16.gmra.mrb[0].mxu0 %v335
        %v475 = vpop.f32.mrb[0].mxu0
        %v476 = vadd.f32 0.0, %v475
        %v477 = vpop.f32.mrb[0].mxu0
        %v478 = vpop.f32.mrb[0].mxu0
        %v479 = vadd.f32 0.0, %v478
        %v480 = vpop.f32.mrb[0].mxu0
        %481 = vmatprep.mubr.bf16.mxu0 0
        %482 = vmatmul.mubr.bf16.gmra.mrb[0].mxu0 %v336
        %v483 = vpop.f32.mrb[0].mxu0
        %v484 = vadd.f32 0.0, %v483
        %v485 = vpop.f32.mrb[0].mxu0
        %v486 = vpop.f32.mrb[0].mxu0
        %v487 = vadd.f32 0.0, %v486
        %v488 = vpop.f32.mrb[0].mxu0
        %489 = vdwg.mxu0
        %v490 = vadd.f32 %v249, %v428
        %v491 = vadd.f32 %v250, %v431
        %v492 = vadd.f32 %v251, %v436
        %v493 = vadd.f32 %v252, %v439
        %v494 = vadd.f32 %v253, %v444
        %v495 = vadd.f32 %v254, %v447
        %v496 = vadd.f32 %v255, %v452
        %v497 = vadd.f32 %v256, %v455
        %v498 = vadd.f32 %v257, %v460
        %v499 = vadd.f32 %v258, %v463
        %v500 = vadd.f32 %v259, %v468
        %v501 = vadd.f32 %v260, %v471
        %v502 = vadd.f32 %v261, %v476
        %v503 = vadd.f32 %v262, %v479
        %v504 = vadd.f32 %v263, %v484
        %v505 = vadd.f32 %v264, %v487
        %506 = vst [vmem:[#allocation2] sm:$0xff] %v490
        %507 = vst [vmem:[#allocation2 + $0x8] sm:$0xff] %v491
        %508 = vst [vmem:[#allocation2 + $0x10] sm:$0xff] %v492
        %509 = vst [vmem:[#allocation2 + $0x18] sm:$0xff] %v493
        %510 = vst [vmem:[#allocation2 + $0x20] sm:$0xff] %v494
        %511 = vst [vmem:[#allocation2 + $0x28] sm:$0xff] %v495
        %512 = vst [vmem:[#allocation2 + $0x30] sm:$0xff] %v496
        %513 = vst [vmem:[#allocation2 + $0x38] sm:$0xff] %v497
        %514 = vst [vmem:[#allocation2 + $0x40] sm:$0xff] %v498
        %515 = vst [vmem:[#allocation2 + $0x48] sm:$0xff] %v499
        %516 = vst [vmem:[#allocation2 + $0x50] sm:$0xff] %v500
        %517 = vst [vmem:[#allocation2 + $0x58] sm:$0xff] %v501
        %518 = vst [vmem:[#allocation2 + $0x60] sm:$0xff] %v502
        %519 = vst [vmem:[#allocation2 + $0x68] sm:$0xff] %v503
        %520 = vst [vmem:[#allocation2 + $0x70] sm:$0xff] %v504
        %521 = vst [vmem:[#allocation2 + $0x78] sm:$0xff] %v505
        // Predicated region
        $region41: #{tpu_custom_call.1} parent=27 // pred_check
          %p522 = pneg %p229
        $region42: #{tpu_custom_call.1} parent=27 // pred_check_branch
          %524 = sbr.rel (%p522) target = $region44
        $region43: #{tpu_custom_call.1} parent=27 // pred_region
          %v525 = vld [vmem:[#allocation2] sm:$0xff]
          %v526 = vld [vmem:[#allocation2 + $0x8] sm:$0xff]
          %v527 = vld [vmem:[#allocation2 + $0x10] sm:$0xff]
          %v528 = vld [vmem:[#allocation2 + $0x18] sm:$0xff]
          %v529 = vld [vmem:[#allocation2 + $0x20] sm:$0xff]
          %v530 = vld [vmem:[#allocation2 + $0x28] sm:$0xff]
          %v531 = vld [vmem:[#allocation2 + $0x30] sm:$0xff]
          %v532 = vld [vmem:[#allocation2 + $0x38] sm:$0xff]
          %v533 = vld [vmem:[#allocation2 + $0x40] sm:$0xff]
          %v534 = vld [vmem:[#allocation2 + $0x48] sm:$0xff]
          %v535 = vld [vmem:[#allocation2 + $0x50] sm:$0xff]
          %v536 = vld [vmem:[#allocation2 + $0x58] sm:$0xff]
          %v537 = vld [vmem:[#allocation2 + $0x60] sm:$0xff]
          %v538 = vld [vmem:[#allocation2 + $0x68] sm:$0xff]
          %v539 = vld [vmem:[#allocation2 + $0x70] sm:$0xff]
          %v540 = vld [vmem:[#allocation2 + $0x78] sm:$0xff]
          %v541 = vpack.c.bf16 %v526, %v525
          %v542 = vpack.c.bf16 %v528, %v527
          %v543 = vpack.c.bf16 %v530, %v529
          %v544 = vpack.c.bf16 %v532, %v531
          %v545 = vpack.c.bf16 %v534, %v533
          %v546 = vpack.c.bf16 %v536, %v535
          %v547 = vpack.c.bf16 %v538, %v537
          %v548 = vpack.c.bf16 %v540, %v539
          %v557 = vunpack.c.l.b16 %v541
          %v558 = vunpack.c.h.b16 %v541
          %v559 = vunpack.c.l.b16 %v542
          %v560 = vunpack.c.h.b16 %v542
          %v561 = vunpack.c.l.b16 %v543
          %v562 = vunpack.c.h.b16 %v543
          %v563 = vunpack.c.l.b16 %v544
          %v564 = vunpack.c.h.b16 %v544
          %v565 = vunpack.c.l.b16 %v545
          %v566 = vunpack.c.h.b16 %v545
          %v567 = vunpack.c.l.b16 %v546
          %v568 = vunpack.c.h.b16 %v546
          %v569 = vunpack.c.l.b16 %v547
          %v570 = vunpack.c.h.b16 %v547
          %v571 = vunpack.c.l.b16 %v548
          %v572 = vunpack.c.h.b16 %v548
          %v573 = vpack.c.b16 %v557, %v557
          %v574 = vpack.c.b16 %v558, %v558
          %v575 = vpack.c.b16 %v559, %v559
          %v576 = vpack.c.b16 %v560, %v560
          %v577 = vpack.c.b16 %v561, %v561
          %v578 = vpack.c.b16 %v562, %v562
          %v579 = vpack.c.b16 %v563, %v563
          %v580 = vpack.c.b16 %v564, %v564
          %v581 = vpack.c.b16 %v565, %v565
          %v582 = vpack.c.b16 %v566, %v566
          %v583 = vpack.c.b16 %v567, %v567
          %v584 = vpack.c.b16 %v568, %v568
          %v585 = vpack.c.b16 %v569, %v569
          %v586 = vpack.c.b16 %v570, %v570
          %v587 = vpack.c.b16 %v571, %v571
          %v588 = vpack.c.b16 %v572, %v572
          %605 = vst [vmem:[%s224] sm:$0xf] %v573
          %606 = vst [vmem:[%s224 + $0x4] sm:$0xf] %v574
          %607 = vst [vmem:[%s224 + $0x8] sm:$0xf] %v575
          %608 = vst [vmem:[%s224 + $0xc] sm:$0xf] %v576
          %609 = vst [vmem:[%s224 + $0x10] sm:$0xf] %v577
          %610 = vst [vmem:[%s224 + $0x14] sm:$0xf] %v578
          %611 = vst [vmem:[%s224 + $0x18] sm:$0xf] %v579
          %612 = vst [vmem:[%s224 + $0x1c] sm:$0xf] %v580
          %613 = vst [vmem:[%s224 + $0x20] sm:$0xf] %v581
          %614 = vst [vmem:[%s224 + $0x24] sm:$0xf] %v582
          %615 = vst [vmem:[%s224 + $0x28] sm:$0xf] %v583
          %616 = vst [vmem:[%s224 + $0x2c] sm:$0xf] %v584
          %617 = vst [vmem:[%s224 + $0x30] sm:$0xf] %v585
          %618 = vst [vmem:[%s224 + $0x34] sm:$0xf] %v586
          %619 = vst [vmem:[%s224 + $0x38] sm:$0xf] %v587
          %620 = vst [vmem:[%s224 + $0x3c] sm:$0xf] %v588
        $region44: #{tpu_custom_call.1} parent=27 // pred_fallthru
          _
        %s621 = sand.u32 %s116, 1
        %s622 = scalar_lea.sflag [#allocation5], %s621
        %s623 = sand.u32 %s116, 1
        %s624 = smul.addr %s623, 64
        %s625 = scalar_lea.vmem [#allocation8], %s624
        // Predicated region
        $region45: #{tpu_custom_call.1} parent=27 // pred_check
          %p626 = pneg %p126
        $region46: #{tpu_custom_call.1} parent=27 // pred_check_branch
          %628 = sbr.rel (%p626) target = $region48
        $region47: #{tpu_custom_call.1} parent=27 // pred_region
          %s629 = smul.u32 16, %s27
          %s631 = ssub.s32 1024, 1024
          %632 = vsyncadd %s622, %s631
          %s633 = sadd.s32 %s28, %s629
          %s634 = smul.addr %s26, 16
          %s635 = sadd.s32 %s633, %s634
          %s636 = smul.addr %s635, 64
          %s637 = scalar_lea.hbm %s2, %s636
          %s638 = sshll.u32 %s625, 4
          %s639 = int_to_ptr.vmem [resolvable:$true] %s638
          %644 = dma.vmem_to_hbm [thread:$0]  %s639, 1024, %s637, %s622, 64, 64, 4
        $region48: #{tpu_custom_call.1} parent=27 // pred_fallthru
          _
      $region28: #{tpu_custom_call.1} parent=5 // pred_fallthru
        _
      %p645 = scmp.le.s32.totalorder 2, %s15
      // Predicated region
      $region49: #{tpu_custom_call.1} parent=5 // pred_check
        %p646 = pneg %p645
      $region50: #{tpu_custom_call.1} parent=5 // pred_check_branch
        %648 = sbr.rel (%p646) target = $region52
      $region51: #{tpu_custom_call.1} parent=5 // pred_region
        %s649 = ssub.s32 %s15, 2
        // Predicated region
        $region53: #{tpu_custom_call.1} parent=51 // pred_check
          %p650 = pneg %p132
        $region54: #{tpu_custom_call.1} parent=51 // pred_check_branch
          %652 = sbr.rel (%p650) target = $region56
        $region55: #{tpu_custom_call.1} parent=51 // pred_region
          %s653 = sand.u32 %s117, 1
          %s654 = scalar_lea.sflag [#allocation5], %s653
          %s655 = sand.u32 %s117, 1
          %s656 = smul.addr %s655, 64
          %s657 = scalar_lea.vmem [#allocation8], %s656
          %658 = dma.done %s654, 1024
        $region56: #{tpu_custom_call.1} parent=51 // pred_fallthru
          _
      $region52: #{tpu_custom_call.1} parent=5 // pred_fallthru
        _
    $region6: #{tpu_custom_call.1} parent=1 // loop_footer
      %s19 = sadd.s32 1, %s15
    $region7: #{tpu_custom_call.1} parent=1 // loop_footer_branch
      %14 = sbr.rel target = $region3
    $region8: #{tpu_custom_call.1} parent=1 // loop_exit
      _
    %659 = vsyncpa [#allocation4], 1
    %s660 = scalar_lea.sflag [#allocation4], 1
    %661 = vsyncpa %s660, 1
    %662 = vsyncpa [#allocation7], 1
    %663 = vsyncpa [#allocation5], 1
    %s664 = scalar_lea.sflag [#allocation5], 1
    %665 = vsyncpa %s664, 1

</llo_original>
